<compile_context>
chip_gen: v7x
topology: tpu7x:2x2x1
jax: 0.10.0
libtpu: 0.0.40
codegen_flags: <defaults>
</compile_context>

<pallas_src>
import functools

import jax
import jax.numpy as jnp
from jax.experimental import pallas as pl
from jax.experimental.pallas import tpu as pltpu

_COMPUTE_DTYPE = jnp.bfloat16


def _round_up(x, m):
    return (x + m - 1) // m * m


@functools.lru_cache(maxsize=1)
def _vmem_capacity_bytes():
    try:
        return int(pltpu.get_tpu_info().vmem_capacity_bytes)
    except Exception:
        return 128 << 20  # conservative default (v5e/v6e class)


def _footprint_bytes(tm, tn, hidden):
    bpe = 2  # bf16
    return (2 * tm * hidden * bpe        # x tile (double-buffered)
            + 2 * hidden * tn * bpe      # gate weight tile
            + 2 * hidden * tn * bpe      # up weight tile
            + 2 * tn * hidden * bpe      # down weight tile
            + 2 * tm * hidden * bpe      # bf16 output tile
            + tm * hidden * 4)           # f32 accumulator scratch


def _choose_tiles(m, hidden, inter, tile_m, tile_n):
    vmem_cap = _vmem_capacity_bytes()
    big_vmem = vmem_cap >= (96 << 20)    # v5e/v6e: 128 MiB; v7x per-TC: 64 MiB

    m16 = _round_up(m, 16)               # bf16 packs 16 rows per vreg
    if tile_m is None:
        tile_m = 512 if big_vmem else 384
    tile_m = min(_round_up(tile_m, 16), m16)

    if tile_n is None:
        tile_n = 512 if big_vmem else 256
    tile_n = min(_round_up(tile_n, 128), _round_up(inter, 128))

    # Shrink tiles until the double-buffered footprint fits ~3/4 of VMEM.
    budget = (vmem_cap * 3) // 4
    while _footprint_bytes(tile_m, tile_n, hidden) > budget:
        if tile_n > 128 and tile_n >= tile_m:
            tile_n = max(128, ((tile_n // 2 + 127) // 128) * 128)
        elif tile_m > 16:
            tile_m = max(16, (tile_m // 2 // 16) * 16)
        else:
            break
    return tile_m, tile_n, vmem_cap, big_vmem


def prepare_weights(w_gate, w_up, w_down, *, tile_n=512):
    """Cast weights to bf16 and pad the intermediate dim.

    Call this ONCE, outside the per-token forward.  (Doing the cast/pad inside
    the jitted forward re-streams every weight byte through HBM on every call,
    which dominates decode latency.)  Zero-padded I columns/rows contribute
    exactly silu(0)*0 = 0 downstream, so padding is numerically inert.
    """
    inter = w_gate.shape[1]
    i_pad = _round_up(inter, tile_n)
    wg = w_gate.astype(_COMPUTE_DTYPE)
    wu = w_up.astype(_COMPUTE_DTYPE)
    wd = w_down.astype(_COMPUTE_DTYPE)
    if i_pad != inter:
        wg = jnp.pad(wg, ((0, 0), (0, i_pad - inter)))
        wu = jnp.pad(wu, ((0, 0), (0, i_pad - inter)))
        wd = jnp.pad(wd, ((0, i_pad - inter), (0, 0)))
    return wg, wu, wd


def _mlp_kernel(x_ref, wg_ref, wu_ref, wd_ref, o_ref, acc_ref, *, n_j):
    # x_ref:   (tm, H)   bf16 activation tile (resident across the j axis)
    # wg_ref:  (H, tn)   gate-proj weight tile for I-block j
    # wu_ref:  (H, tn)   up-proj weight tile for I-block j
    # wd_ref:  (tn, H)   down-proj weight tile for I-block j
    # o_ref:   (tm, H)   bf16 output tile (written once, at the last j step)
    # acc_ref: (tm, H)   f32 partial-sum accumulator (VMEM scratch)
    j = pl.program_id(2)

    x = x_ref[...]
    gate = jnp.dot(x, wg_ref[...], preferred_element_type=jnp.float32)
    up = jnp.dot(x, wu_ref[...], preferred_element_type=jnp.float32)
    # SwiGLU epilogue in f32 (sigmoid -> EUP, multiplies -> VPU).
    h = (gate * jax.nn.sigmoid(gate) * up).astype(wd_ref.dtype)
    partial = jnp.dot(h, wd_ref[...], preferred_element_type=jnp.float32)

    if n_j == 1:
        # Single reduction step: skip the accumulator round-trip entirely.
        o_ref[...] = partial.astype(o_ref.dtype)
    else:
        # Fuse the init into the first dot (no zero-fill + readback).
        @pl.when(j == 0)
        def _():
            acc_ref[...] = partial

        @pl.when(j > 0)
        def _():
            acc_ref[...] += partial

        @pl.when(j == n_j - 1)
        def _():
            o_ref[...] = acc_ref[...].astype(o_ref.dtype)


@functools.partial(jax.jit, static_argnames=("tile_m", "tile_n", "force_i_split"))
def qllama_mlp(x, w_gate, w_up, w_down, *, tile_m=None, tile_n=None,
               force_i_split=None):
    """Fused SwiGLU MLP.

    x:       (bsz, q_len, hidden)
    w_gate:  (hidden, intermediate)   -- stored as W^T of nn.Linear
    w_up:    (hidden, intermediate)
    w_down:  (intermediate, hidden)
    returns  (bsz, q_len, hidden) in x.dtype

    Weights should be pre-prepared with prepare_weights(); raw f32 weights are
    accepted (defensive fallback) but incur a per-call cast.
    """
    bsz, q_len, hidden = x.shape
    inter = w_gate.shape[1]
    m = bsz * q_len

    tile_m, tile_n, vmem_cap, big_vmem = _choose_tiles(
        m, hidden, inter, tile_m, tile_n)

    # ---- activations: cast / pad M to a tile multiple -------------------
    x2d = x.reshape(m, hidden)
    if x2d.dtype != _COMPUTE_DTYPE:
        x2d = x2d.astype(_COMPUTE_DTYPE)
    m_pad = _round_up(m, tile_m)
    if m_pad != m:
        x2d = jnp.pad(x2d, ((0, m_pad - m), (0, 0)))

    # ---- weights: expected pre-prepared; static-shape/dtype fallback ----
    i_pad = _round_up(inter, tile_n)
    if w_gate.dtype != _COMPUTE_DTYPE or w_gate.shape[1] != i_pad:
        w_gate, w_up, w_down = prepare_weights(
            w_gate, w_up, w_down, tile_n=tile_n)

    n_i = m_pad // tile_m
    n_j = i_pad // tile_n

    # ---- optional 2-way I split across TensorCores (v7x decode) ---------
    splittable = (n_i == 1 and n_j >= 2 and n_j % 2 == 0)
    if force_i_split is None:
        do_split = (not big_vmem) and splittable      # 64-MiB parts are 2-TC
    else:
        do_split = bool(force_i_split) and splittable
    n_c = 2 if do_split else 1
    n_jc = n_j // n_c

    grid = (n_c, n_i, n_jc)
    kernel = functools.partial(_mlp_kernel, n_j=n_jc)

    in_specs = [
        pl.BlockSpec((tile_m, hidden), lambda c, i, j: (i, 0)),
        pl.BlockSpec((hidden, tile_n), lambda c, i, j: (0, c * n_jc + j)),
        pl.BlockSpec((hidden, tile_n), lambda c, i, j: (0, c * n_jc + j)),
        pl.BlockSpec((tile_n, hidden), lambda c, i, j: (c * n_jc + j, 0)),
    ]
    if n_c == 1:
        out_shape = jax.ShapeDtypeStruct((m_pad, hidden), _COMPUTE_DTYPE)
        out_specs = pl.BlockSpec((tile_m, hidden), lambda c, i, j: (i, 0))
    else:
        out_shape = jax.ShapeDtypeStruct((n_c, m_pad, hidden), _COMPUTE_DTYPE)
        out_specs = pl.BlockSpec((pl.Squeezed(), tile_m, hidden),
                                 lambda c, i, j: (c, i, 0))

    vmem_limit = int(min(
        max(_footprint_bytes(tile_m, tile_n, hidden) + (4 << 20), 32 << 20),
        vmem_cap - (8 << 20)))

    out = pl.pallas_call(
        kernel,
        out_shape=out_shape,
        grid_spec=pltpu.PrefetchScalarGridSpec(
            num_scalar_prefetch=0,
            grid=grid,
            in_specs=in_specs,
            out_specs=out_specs,
            scratch_shapes=[pltpu.VMEM((tile_m, hidden), jnp.float32)],
        ),
        compiler_params=pltpu.CompilerParams(
            dimension_semantics=("parallel", "parallel", "arbitrary"),
            vmem_limit_bytes=vmem_limit,
        ),
    )(x2d, w_gate, w_up, w_down)

    if n_c == 2:
        out2d = out[0].astype(jnp.float32) + out[1].astype(jnp.float32)
    else:
        out2d = out
    return out2d[:m].astype(x.dtype).reshape(bsz, q_len, hidden)


def _reference_mlp(x, w_gate, w_up, w_down, compute_dtype=jnp.bfloat16):
    """Pure-JAX reference following the same bf16-weight / f32-accum path."""
    xb = x.astype(compute_dtype)
    g = jnp.dot(xb, w_gate.astype(compute_dtype),
                preferred_element_type=jnp.float32)
    u = jnp.dot(xb, w_up.astype(compute_dtype),
                preferred_element_type=jnp.float32)
    h = g * jax.nn.sigmoid(g) * u
    return jnp.dot(h.astype(compute_dtype), w_down.astype(compute_dtype),
                   preferred_element_type=jnp.float32).astype(x.dtype)


if __name__ == "__main__":
    # Small Llama-like shapes.
    bsz, q_len, hidden, inter = 2, 8, 256, 512

    key = jax.random.PRNGKey(0)
    kx, kg, ku, kd = jax.random.split(key, 4)
    x = jax.random.normal(kx, (bsz, q_len, hidden), dtype=jnp.float32)
    # Synthetic weights stored (in, out), i.e. W^T of nn.Linear.
    w_gate = jax.random.normal(kg, (hidden, inter), dtype=jnp.float32) * 0.02
    w_up = jax.random.normal(ku, (hidden, inter), dtype=jnp.float32) * 0.02
    w_down = jax.random.normal(kd, (inter, hidden), dtype=jnp.float32) * 0.02

    # Weight prep happens ONCE, outside the jitted forward.
    wg_p, wu_p, wd_p = prepare_weights(w_gate, w_up, w_down, tile_n=512)

    ref = _reference_mlp(x, w_gate, w_up, w_down)

    # 1) Auto-tiled path (exercises n_j==1 fast path on small shapes).
    out = jax.block_until_ready(qllama_mlp(x, wg_p, wu_p, wd_p))
    assert out.shape == (bsz, q_len, hidden) and out.dtype == x.dtype
    assert jnp.allclose(out, ref, atol=1e-2, rtol=1e-2), (
        float(jnp.max(jnp.abs(out - ref))))

    # 2) Forced small tile_n (exercises the f32 accumulator over the I axis).
    out2 = jax.block_until_ready(qllama_mlp(x, wg_p, wu_p, wd_p, tile_n=128))
    assert jnp.allclose(out2, ref, atol=1e-2, rtol=1e-2), (
        float(jnp.max(jnp.abs(out2 - ref))))

    # 3) Forced 2-way I split (the v7x decode dual-TC path) on any chip.
    out3 = jax.block_until_ready(
        qllama_mlp(x, wg_p, wu_p, wd_p, tile_n=128, force_i_split=True))
    assert jnp.allclose(out3, ref, atol=1e-2, rtol=1e-2), (
        float(jnp.max(jnp.abs(out3 - ref))))

    print("KERNEL_OK")
</pallas_src>

<mosaic_0001>
module attributes {stable_mosaic.version = 11 : i64} {
  func.func @_mlp_kernel(%arg0: i32, %arg1: i32, %arg2: i32, %arg3: memref<16x256xbf16, #tpu.memory_space<vmem>>, %arg4: memref<256x512xbf16, #tpu.memory_space<vmem>>, %arg5: memref<256x512xbf16, #tpu.memory_space<vmem>>, %arg6: memref<512x256xbf16, #tpu.memory_space<vmem>>, %arg7: memref<16x256xbf16, #tpu.memory_space<vmem>>, %arg8: memref<16x256xf32, #tpu.memory_space<vmem>>) attributes {dimension_semantics = [#tpu.dimension_semantics<parallel>, #tpu.dimension_semantics<parallel>, #tpu.dimension_semantics<arbitrary>], iteration_bounds = array<i64: 1, 1, 1>, scalar_prefetch = 0 : i64, scratch_operands = 1 : i64, tpu.core_type = #tpu.core_type<tc>, window_params = [{transform_indices = @transform_0, window_bounds = array<i64: 16, 256>}, {transform_indices = @transform_1, window_bounds = array<i64: 256, 512>}, {transform_indices = @transform_2, window_bounds = array<i64: 256, 512>}, {transform_indices = @transform_3, window_bounds = array<i64: 512, 256>}, {transform_indices = @transform_4, window_bounds = array<i64: 16, 256>}]} {
    %c0 = arith.constant 0 : index
    %c0_0 = arith.constant 0 : index
    %0 = vector.load %arg3[%c0, %c0_0] : memref<16x256xbf16, #tpu.memory_space<vmem>>, vector<16x256xbf16>
    %c0_1 = arith.constant 0 : index
    %c0_2 = arith.constant 0 : index
    %1 = vector.load %arg4[%c0_1, %c0_2] : memref<256x512xbf16, #tpu.memory_space<vmem>>, vector<256x512xbf16>
    %cst = arith.constant dense<0.000000e+00> : vector<16x512xf32>
    %2 = tpu.matmul %0, %1, %cst {dimension_numbers = #tpu.dot_dimension_numbers<[1], [0], [0], [1], [0, 0, 1, 1], [], []>} : vector<16x256xbf16>, vector<256x512xbf16>, vector<16x512xf32> -> vector<16x512xf32>
    %c0_3 = arith.constant 0 : index
    %c0_4 = arith.constant 0 : index
    %3 = vector.load %arg5[%c0_3, %c0_4] : memref<256x512xbf16, #tpu.memory_space<vmem>>, vector<256x512xbf16>
    %cst_5 = arith.constant dense<0.000000e+00> : vector<16x512xf32>
    %4 = tpu.matmul %0, %3, %cst_5 {dimension_numbers = #tpu.dot_dimension_numbers<[1], [0], [0], [1], [0, 0, 1, 1], [], []>} : vector<16x256xbf16>, vector<256x512xbf16>, vector<16x512xf32> -> vector<16x512xf32>
    %5 = arith.negf %2 : vector<16x512xf32>
    %6 = math.exp %5 : vector<16x512xf32>
    %cst_6 = arith.constant 1.000000e+00 : f32
    %7 = vector.broadcast %cst_6 : f32 to vector<16x512xf32>
    %8 = arith.addf %7, %6 : vector<16x512xf32>
    %9 = arith.divf %7, %8 : vector<16x512xf32>
    %10 = arith.mulf %2, %9 : vector<16x512xf32>
    %11 = arith.mulf %10, %4 : vector<16x512xf32>
    %12 = arith.truncf %11 : vector<16x512xf32> to vector<16x512xbf16>
    %c0_7 = arith.constant 0 : index
    %c0_8 = arith.constant 0 : index
    %13 = vector.load %arg6[%c0_7, %c0_8] : memref<512x256xbf16, #tpu.memory_space<vmem>>, vector<512x256xbf16>
    %cst_9 = arith.constant dense<0.000000e+00> : vector<16x256xf32>
    %14 = tpu.matmul %12, %13, %cst_9 {dimension_numbers = #tpu.dot_dimension_numbers<[1], [0], [0], [1], [0, 0, 1, 1], [], []>} : vector<16x512xbf16>, vector<512x256xbf16>, vector<16x256xf32> -> vector<16x256xf32>
    %15 = arith.truncf %14 : vector<16x256xf32> to vector<16x256xbf16>
    %c0_10 = arith.constant 0 : index
    %c0_11 = arith.constant 0 : index
    %16 = vector.load %arg7[%c0_10, %c0_11] : memref<16x256xbf16, #tpu.memory_space<vmem>>, vector<16x256xbf16>
    tpu.vector_store %arg7[%c0_10, %c0_11], %15 {strides = array<i32>} : memref<16x256xbf16, #tpu.memory_space<vmem>>, vector<16x256xbf16>,
    return
  }
  func.func @transform_0(%arg0: i32, %arg1: i32, %arg2: i32) -> (i32, i32) {
    %c0_i32 = arith.constant 0 : i32
    %c0_i32_0 = arith.constant 0 : i32
    return %arg1, %c0_i32 : i32, i32
  }
  func.func @transform_1(%arg0: i32, %arg1: i32, %arg2: i32) -> (i32, i32) {
    %c1_i32 = arith.constant 1 : i32
    %0 = arith.muli %arg0, %c1_i32 : i32
    %1 = arith.addi %0, %arg2 : i32
    %c0_i32 = arith.constant 0 : i32
    %c0_i32_0 = arith.constant 0 : i32
    return %c0_i32, %1 : i32, i32
  }
  func.func @transform_2(%arg0: i32, %arg1: i32, %arg2: i32) -> (i32, i32) {
    %c1_i32 = arith.constant 1 : i32
    %0 = arith.muli %arg0, %c1_i32 : i32
    %1 = arith.addi %0, %arg2 : i32
    %c0_i32 = arith.constant 0 : i32
    %c0_i32_0 = arith.constant 0 : i32
    return %c0_i32, %1 : i32, i32
  }
  func.func @transform_3(%arg0: i32, %arg1: i32, %arg2: i32) -> (i32, i32) {
    %c1_i32 = arith.constant 1 : i32
    %0 = arith.muli %arg0, %c1_i32 : i32
    %1 = arith.addi %0, %arg2 : i32
    %c0_i32 = arith.constant 0 : i32
    %c0_i32_0 = arith.constant 0 : i32
    return %1, %c0_i32 : i32, i32
  }
  func.func @transform_4(%arg0: i32, %arg1: i32, %arg2: i32) -> (i32, i32) {
    %c0_i32 = arith.constant 0 : i32
    %c0_i32_0 = arith.constant 0 : i32
    return %arg1, %c0_i32 : i32, i32
  }
}

</mosaic_0001>

<llo_original>
// kernel: qllama_mlp.1
$region0: #{qllama_mlp.1}
  #allocation0 [shape = 'u32[]', space=smem, size = 0x4, offset = 0x4, fixed_abs, tag = 'smem constant byte address 0x4 - core index']
  #allocation1 [shape = 'u32[144,128]{1,0:T(1,128)}', space=vmem, size = 0x12000, scoped, tag = 'internal scratch']
  #allocation2 [shape = 'f32[16,256]{1,0:T(8,128)}', space=vmem, size = 0x4000, scoped, tag = 'scratch operand']
  %s0 = inlined_call_operand.vmem [shape: bf16[16,256], index: 0, kind: input, shape index: {}]
  %s1 = inlined_call_operand.hbm [shape: bf16[256,512], index: 1, kind: input, shape index: {}]
  %s2 = inlined_call_operand.hbm [shape: bf16[256,512], index: 2, kind: input, shape index: {}]
  %s3 = inlined_call_operand.hbm [shape: bf16[512,256], index: 3, kind: input, shape index: {}]
  %s4 = inlined_call_operand.vmem [shape: bf16[16,256], index: 4, kind: output, shape index: {}]
  %s5 = sld [smem:[#allocation0]]
  $region38: #{qllama_mlp.1} parent=0
    _
  %s7 = ssub.s32 1, %s5
  %s8 = scalar_select 0, %s7, %s5
  $region1: #{qllama_mlp.1} parent=0
    #allocation3 [shape = 'u8[262144]{0}', space=vmem, size = 0x40000, scoped, tag = 'input window, operand 1, single buffered']
    #allocation4 [shape = 's32[1]{0}', space=sflag, size = 0x4, scoped, tag = 'scoped memory for qllama_mlp.1']
    #allocation5 [shape = 'u8[262144]{0}', space=vmem, size = 0x40000, scoped, tag = 'input window, operand 2, single buffered']
    #allocation6 [shape = 's32[1]{0}', space=sflag, size = 0x4, scoped, tag = 'scoped memory for qllama_mlp.1']
    #allocation7 [shape = 'u8[262144]{0}', space=vmem, size = 0x40000, scoped, tag = 'input window, operand 3, single buffered']
    %9 = vsyncpa [#allocation4], 0
    %10 = vsyncpa [#allocation6], 0
    // Predicated region
    $region2: #{qllama_mlp.1} parent=1 // pred_check
      _
    $region3: #{qllama_mlp.1} parent=1 // pred_check_branch
      %12 = sbr.rel (0) target = $region5
    $region4: #{qllama_mlp.1} parent=1 // pred_region
      _
    $region5: #{qllama_mlp.1} parent=1 // pred_fallthru
      _
    // Predicated region
    $region6: #{qllama_mlp.1} parent=1 // pred_check
      _
    $region7: #{qllama_mlp.1} parent=1 // pred_check_branch
      %14 = sbr.rel (0) target = $region9
    $region8: #{qllama_mlp.1} parent=1 // pred_region
      %s15 = sadd.s32 0, 0
      %s16 = smul.u32 4, %s15
      %s18 = ssub.s32 8192, 8192
      %19 = vsyncadd [#allocation4], %s18
      %s20 = smul.addr %s16, 64
      %s21 = scalar_lea.hbm %s1, %s20
      %s22 = sshll.u32 [#allocation3], 4
      %s23 = int_to_ptr.vmem [resolvable:$true] %s22
      %28 = dma.hbm_to_vmem [thread:$0]  %s21, 8192, %s23, [#allocation4], 256, 256, 16
    $region9: #{qllama_mlp.1} parent=1 // pred_fallthru
      _
    // Predicated region
    $region10: #{qllama_mlp.1} parent=1 // pred_check
      _
    $region11: #{qllama_mlp.1} parent=1 // pred_check_branch
      %30 = sbr.rel (0) target = $region13
    $region12: #{qllama_mlp.1} parent=1 // pred_region
      %s31 = sadd.s32 0, 0
      %s32 = smul.u32 4, %s31
      %s34 = ssub.s32 8192, 8192
      %35 = vsyncadd [#allocation6], %s34
      %s36 = smul.addr %s32, 64
      %s37 = scalar_lea.hbm %s2, %s36
      %s38 = sshll.u32 [#allocation5], 4
      %s39 = int_to_ptr.vmem [resolvable:$true] %s38
      %44 = dma.hbm_to_vmem [thread:$0]  %s37, 8192, %s39, [#allocation6], 256, 256, 16
    $region13: #{qllama_mlp.1} parent=1 // pred_fallthru
      _
    // Predicated region
    $region14: #{qllama_mlp.1} parent=1 // pred_check
      _
    $region15: #{qllama_mlp.1} parent=1 // pred_check_branch
      %46 = sbr.rel (0) target = $region17
    $region16: #{qllama_mlp.1} parent=1 // pred_region
      %s47 = sadd.s32 0, 0
      %s48 = smul.u32 64, %s47
      %s50 = ssub.s32 8192, 8192
      %51 = vsyncadd [#allocation6], %s50
      %s52 = smul.addr %s48, 2
      %s53 = smul.addr %s52, 64
      %s54 = scalar_lea.hbm %s3, %s53
      %s55 = sshll.u32 [#allocation7], 4
      %s56 = int_to_ptr.vmem [resolvable:$true] %s55
      %61 = dma.hbm_to_vmem [thread:$0]  %s54, 8192, %s56, [#allocation6], 128, 128, 8
    $region17: #{qllama_mlp.1} parent=1 // pred_fallthru
      _
    // Predicated region
    $region18: #{qllama_mlp.1} parent=1 // pred_check
      _
    $region19: #{qllama_mlp.1} parent=1 // pred_check_branch
      %63 = sbr.rel (0) target = $region21
    $region20: #{qllama_mlp.1} parent=1 // pred_region
      %64 = dma.done [#allocation4], 8192
    $region21: #{qllama_mlp.1} parent=1 // pred_fallthru
      _
    // Predicated region
    $region22: #{qllama_mlp.1} parent=1 // pred_check
      _
    $region23: #{qllama_mlp.1} parent=1 // pred_check_branch
      %66 = sbr.rel (0) target = $region25
    $region24: #{qllama_mlp.1} parent=1 // pred_region
      %67 = dma.done [#allocation6], 8192
    $region25: #{qllama_mlp.1} parent=1 // pred_fallthru
      _
    // Predicated region
    $region26: #{qllama_mlp.1} parent=1 // pred_check
      _
    $region27: #{qllama_mlp.1} parent=1 // pred_check_branch
      %69 = sbr.rel (0) target = $region29
    $region28: #{qllama_mlp.1} parent=1 // pred_region
      %70 = dma.done [#allocation6], 8192
    $region29: #{qllama_mlp.1} parent=1 // pred_fallthru
      _
    %s71 = sadd.s32 0, 0
    %s72 = smul.u32 4, %s71
    %s73 = sadd.s32 0, 0
    %s74 = smul.u32 4, %s73
    %s75 = sadd.s32 0, 0
    %s76 = smul.u32 64, %s75
    %v77 = vld [vmem:[%s0] sm:$0xff]
    %v78 = vld [vmem:[%s0 + $0x8] sm:$0xff]
    %v79 = vld [vmem:[#allocation3] sm:$0xff]
    %v80 = vld [vmem:[#allocation3 + $0x8] sm:$0xff]
    %v81 = vld [vmem:[#allocation3 + $0x10] sm:$0xff]
    %v82 = vld [vmem:[#allocation3 + $0x18] sm:$0xff]
    %v83 = vld [vmem:[#allocation3 + $0x20] sm:$0xff]
    %v84 = vld [vmem:[#allocation3 + $0x28] sm:$0xff]
    %v85 = vld [vmem:[#allocation3 + $0x30] sm:$0xff]
    %v86 = vld [vmem:[#allocation3 + $0x38] sm:$0xff]
    %v87 = vld [vmem:[#allocation3 + $0x40] sm:$0xff]
    %v88 = vld [vmem:[#allocation3 + $0x48] sm:$0xff]
    %v89 = vld [vmem:[#allocation3 + $0x50] sm:$0xff]
    %v90 = vld [vmem:[#allocation3 + $0x58] sm:$0xff]
    %v91 = vld [vmem:[#allocation3 + $0x60] sm:$0xff]
    %v92 = vld [vmem:[#allocation3 + $0x68] sm:$0xff]
    %v93 = vld [vmem:[#allocation3 + $0x70] sm:$0xff]
    %v94 = vld [vmem:[#allocation3 + $0x78] sm:$0xff]
    %v95 = vld [vmem:[#allocation3 + $0x80] sm:$0xff]
    %v96 = vld [vmem:[#allocation3 + $0x88] sm:$0xff]
    %v97 = vld [vmem:[#allocation3 + $0x90] sm:$0xff]
    %v98 = vld [vmem:[#allocation3 + $0x98] sm:$0xff]
    %v99 = vld [vmem:[#allocation3 + $0xa0] sm:$0xff]
    %v100 = vld [vmem:[#allocation3 + $0xa8] sm:$0xff]
    %v101 = vld [vmem:[#allocation3 + $0xb0] sm:$0xff]
    %v102 = vld [vmem:[#allocation3 + $0xb8] sm:$0xff]
    %v103 = vld [vmem:[#allocation3 + $0xc0] sm:$0xff]
    %v104 = vld [vmem:[#allocation3 + $0xc8] sm:$0xff]
    %v105 = vld [vmem:[#allocation3 + $0xd0] sm:$0xff]
    %v106 = vld [vmem:[#allocation3 + $0xd8] sm:$0xff]
    %v107 = vld [vmem:[#allocation3 + $0xe0] sm:$0xff]
    %v108 = vld [vmem:[#allocation3 + $0xe8] sm:$0xff]
    %v109 = vld [vmem:[#allocation3 + $0xf0] sm:$0xff]
    %v110 = vld [vmem:[#allocation3 + $0xf8] sm:$0xff]
    %v111 = vld [vmem:[#allocation3 + $0x100] sm:$0xff]
    %v112 = vld [vmem:[#allocation3 + $0x108] sm:$0xff]
    %v113 = vld [vmem:[#allocation3 + $0x110] sm:$0xff]
    %v114 = vld [vmem:[#allocation3 + $0x118] sm:$0xff]
    %v115 = vld [vmem:[#allocation3 + $0x120] sm:$0xff]
    %v116 = vld [vmem:[#allocation3 + $0x128] sm:$0xff]
    %v117 = vld [vmem:[#allocation3 + $0x130] sm:$0xff]
    %v118 = vld [vmem:[#allocation3 + $0x138] sm:$0xff]
    %v119 = vld [vmem:[#allocation3 + $0x140] sm:$0xff]
    %v120 = vld [vmem:[#allocation3 + $0x148] sm:$0xff]
    %v121 = vld [vmem:[#allocation3 + $0x150] sm:$0xff]
    %v122 = vld [vmem:[#allocation3 + $0x158] sm:$0xff]
    %v123 = vld [vmem:[#allocation3 + $0x160] sm:$0xff]
    %v124 = vld [vmem:[#allocation3 + $0x168] sm:$0xff]
    %v125 = vld [vmem:[#allocation3 + $0x170] sm:$0xff]
    %v126 = vld [vmem:[#allocation3 + $0x178] sm:$0xff]
    %v127 = vld [vmem:[#allocation3 + $0x180] sm:$0xff]
    %v128 = vld [vmem:[#allocation3 + $0x188] sm:$0xff]
    %v129 = vld [vmem:[#allocation3 + $0x190] sm:$0xff]
    %v130 = vld [vmem:[#allocation3 + $0x198] sm:$0xff]
    %v131 = vld [vmem:[#allocation3 + $0x1a0] sm:$0xff]
    %v132 = vld [vmem:[#allocation3 + $0x1a8] sm:$0xff]
    %v133 = vld [vmem:[#allocation3 + $0x1b0] sm:$0xff]
    %v134 = vld [vmem:[#allocation3 + $0x1b8] sm:$0xff]
    %v135 = vld [vmem:[#allocation3 + $0x1c0] sm:$0xff]
    %v136 = vld [vmem:[#allocation3 + $0x1c8] sm:$0xff]
    %v137 = vld [vmem:[#allocation3 + $0x1d0] sm:$0xff]
    %v138 = vld [vmem:[#allocation3 + $0x1d8] sm:$0xff]
    %v139 = vld [vmem:[#allocation3 + $0x1e0] sm:$0xff]
    %v140 = vld [vmem:[#allocation3 + $0x1e8] sm:$0xff]
    %v141 = vld [vmem:[#allocation3 + $0x1f0] sm:$0xff]
    %v142 = vld [vmem:[#allocation3 + $0x1f8] sm:$0xff]
    %v145 = vunpack.c.l.b16 %v77
    %v146 = vunpack.c.h.b16 %v77
    %v147 = vunpack.c.l.b16 %v78
    %v148 = vunpack.c.h.b16 %v78
    %v149 = vpack.c.b16 %v147, %v145
    %v150 = vpack.c.b16 %v148, %v146
    %v217 = vunpack.c.l.b16 %v79
    %v218 = vunpack.c.h.b16 %v79
    %v219 = vunpack.c.l.b16 %v80
    %v220 = vunpack.c.h.b16 %v80
    %v221 = vunpack.c.l.b16 %v81
    %v222 = vunpack.c.h.b16 %v81
    %v223 = vunpack.c.l.b16 %v82
    %v224 = vunpack.c.h.b16 %v82
    %v225 = vunpack.c.l.b16 %v83
    %v226 = vunpack.c.h.b16 %v83
    %v227 = vunpack.c.l.b16 %v84
    %v228 = vunpack.c.h.b16 %v84
    %v229 = vunpack.c.l.b16 %v85
    %v230 = vunpack.c.h.b16 %v85
    %v231 = vunpack.c.l.b16 %v86
    %v232 = vunpack.c.h.b16 %v86
    %v233 = vunpack.c.l.b16 %v87
    %v234 = vunpack.c.h.b16 %v87
    %v235 = vunpack.c.l.b16 %v88
    %v236 = vunpack.c.h.b16 %v88
    %v237 = vunpack.c.l.b16 %v89
    %v238 = vunpack.c.h.b16 %v89
    %v239 = vunpack.c.l.b16 %v90
    %v240 = vunpack.c.h.b16 %v90
    %v241 = vunpack.c.l.b16 %v91
    %v242 = vunpack.c.h.b16 %v91
    %v243 = vunpack.c.l.b16 %v92
    %v244 = vunpack.c.h.b16 %v92
    %v245 = vunpack.c.l.b16 %v93
    %v246 = vunpack.c.h.b16 %v93
    %v247 = vunpack.c.l.b16 %v94
    %v248 = vunpack.c.h.b16 %v94
    %v249 = vunpack.c.l.b16 %v95
    %v250 = vunpack.c.h.b16 %v95
    %v251 = vunpack.c.l.b16 %v96
    %v252 = vunpack.c.h.b16 %v96
    %v253 = vunpack.c.l.b16 %v97
    %v254 = vunpack.c.h.b16 %v97
    %v255 = vunpack.c.l.b16 %v98
    %v256 = vunpack.c.h.b16 %v98
    %v257 = vunpack.c.l.b16 %v99
    %v258 = vunpack.c.h.b16 %v99
    %v259 = vunpack.c.l.b16 %v100
    %v260 = vunpack.c.h.b16 %v100
    %v261 = vunpack.c.l.b16 %v101
    %v262 = vunpack.c.h.b16 %v101
    %v263 = vunpack.c.l.b16 %v102
    %v264 = vunpack.c.h.b16 %v102
    %v265 = vunpack.c.l.b16 %v103
    %v266 = vunpack.c.h.b16 %v103
    %v267 = vunpack.c.l.b16 %v104
    %v268 = vunpack.c.h.b16 %v104
    %v269 = vunpack.c.l.b16 %v105
    %v270 = vunpack.c.h.b16 %v105
    %v271 = vunpack.c.l.b16 %v106
    %v272 = vunpack.c.h.b16 %v106
    %v273 = vunpack.c.l.b16 %v107
    %v274 = vunpack.c.h.b16 %v107
    %v275 = vunpack.c.l.b16 %v108
    %v276 = vunpack.c.h.b16 %v108
    %v277 = vunpack.c.l.b16 %v109
    %v278 = vunpack.c.h.b16 %v109
    %v279 = vunpack.c.l.b16 %v110
    %v280 = vunpack.c.h.b16 %v110
    %v281 = vunpack.c.l.b16 %v111
    %v282 = vunpack.c.h.b16 %v111
    %v283 = vunpack.c.l.b16 %v112
    %v284 = vunpack.c.h.b16 %v112
    %v285 = vunpack.c.l.b16 %v113
    %v286 = vunpack.c.h.b16 %v113
    %v287 = vunpack.c.l.b16 %v114
    %v288 = vunpack.c.h.b16 %v114
    %v289 = vunpack.c.l.b16 %v115
    %v290 = vunpack.c.h.b16 %v115
    %v291 = vunpack.c.l.b16 %v116
    %v292 = vunpack.c.h.b16 %v116
    %v293 = vunpack.c.l.b16 %v117
    %v294 = vunpack.c.h.b16 %v117
    %v295 = vunpack.c.l.b16 %v118
    %v296 = vunpack.c.h.b16 %v118
    %v297 = vunpack.c.l.b16 %v119
    %v298 = vunpack.c.h.b16 %v119
    %v299 = vunpack.c.l.b16 %v120
    %v300 = vunpack.c.h.b16 %v120
    %v301 = vunpack.c.l.b16 %v121
    %v302 = vunpack.c.h.b16 %v121
    %v303 = vunpack.c.l.b16 %v122
    %v304 = vunpack.c.h.b16 %v122
    %v305 = vunpack.c.l.b16 %v123
    %v306 = vunpack.c.h.b16 %v123
    %v307 = vunpack.c.l.b16 %v124
    %v308 = vunpack.c.h.b16 %v124
    %v309 = vunpack.c.l.b16 %v125
    %v310 = vunpack.c.h.b16 %v125
    %v311 = vunpack.c.l.b16 %v126
    %v312 = vunpack.c.h.b16 %v126
    %v313 = vunpack.c.l.b16 %v127
    %v314 = vunpack.c.h.b16 %v127
    %v315 = vunpack.c.l.b16 %v128
    %v316 = vunpack.c.h.b16 %v128
    %v317 = vunpack.c.l.b16 %v129
    %v318 = vunpack.c.h.b16 %v129
    %v319 = vunpack.c.l.b16 %v130
    %v320 = vunpack.c.h.b16 %v130
    %v321 = vunpack.c.l.b16 %v131
    %v322 = vunpack.c.h.b16 %v131
    %v323 = vunpack.c.l.b16 %v132
    %v324 = vunpack.c.h.b16 %v132
    %v325 = vunpack.c.l.b16 %v133
    %v326 = vunpack.c.h.b16 %v133
    %v327 = vunpack.c.l.b16 %v134
    %v328 = vunpack.c.h.b16 %v134
    %v329 = vunpack.c.l.b16 %v135
    %v330 = vunpack.c.h.b16 %v135
    %v331 = vunpack.c.l.b16 %v136
    %v332 = vunpack.c.h.b16 %v136
    %v333 = vunpack.c.l.b16 %v137
    %v334 = vunpack.c.h.b16 %v137
    %v335 = vunpack.c.l.b16 %v138
    %v336 = vunpack.c.h.b16 %v138
    %v337 = vunpack.c.l.b16 %v139
    %v338 = vunpack.c.h.b16 %v139
    %v339 = vunpack.c.l.b16 %v140
    %v340 = vunpack.c.h.b16 %v140
    %v341 = vunpack.c.l.b16 %v141
    %v342 = vunpack.c.h.b16 %v141
    %v343 = vunpack.c.l.b16 %v142
    %v344 = vunpack.c.h.b16 %v142
    %v345 = vpack.c.b16 %v221, %v217
    %v346 = vpack.c.b16 %v222, %v218
    %v347 = vpack.c.b16 %v223, %v219
    %v348 = vpack.c.b16 %v224, %v220
    %v349 = vpack.c.b16 %v229, %v225
    %v350 = vpack.c.b16 %v230, %v226
    %v351 = vpack.c.b16 %v231, %v227
    %v352 = vpack.c.b16 %v232, %v228
    %v353 = vpack.c.b16 %v237, %v233
    %v354 = vpack.c.b16 %v238, %v234
    %v355 = vpack.c.b16 %v239, %v235
    %v356 = vpack.c.b16 %v240, %v236
    %v357 = vpack.c.b16 %v245, %v241
    %v358 = vpack.c.b16 %v246, %v242
    %v359 = vpack.c.b16 %v247, %v243
    %v360 = vpack.c.b16 %v248, %v244
    %v361 = vpack.c.b16 %v253, %v249
    %v362 = vpack.c.b16 %v254, %v250
    %v363 = vpack.c.b16 %v255, %v251
    %v364 = vpack.c.b16 %v256, %v252
    %v365 = vpack.c.b16 %v261, %v257
    %v366 = vpack.c.b16 %v262, %v258
    %v367 = vpack.c.b16 %v263, %v259
    %v368 = vpack.c.b16 %v264, %v260
    %v369 = vpack.c.b16 %v269, %v265
    %v370 = vpack.c.b16 %v270, %v266
    %v371 = vpack.c.b16 %v271, %v267
    %v372 = vpack.c.b16 %v272, %v268
    %v373 = vpack.c.b16 %v277, %v273
    %v374 = vpack.c.b16 %v278, %v274
    %v375 = vpack.c.b16 %v279, %v275
    %v376 = vpack.c.b16 %v280, %v276
    %v377 = vpack.c.b16 %v285, %v281
    %v378 = vpack.c.b16 %v286, %v282
    %v379 = vpack.c.b16 %v287, %v283
    %v380 = vpack.c.b16 %v288, %v284
    %v381 = vpack.c.b16 %v293, %v289
    %v382 = vpack.c.b16 %v294, %v290
    %v383 = vpack.c.b16 %v295, %v291
    %v384 = vpack.c.b16 %v296, %v292
    %v385 = vpack.c.b16 %v301, %v297
    %v386 = vpack.c.b16 %v302, %v298
    %v387 = vpack.c.b16 %v303, %v299
    %v388 = vpack.c.b16 %v304, %v300
    %v389 = vpack.c.b16 %v309, %v305
    %v390 = vpack.c.b16 %v310, %v306
    %v391 = vpack.c.b16 %v311, %v307
    %v392 = vpack.c.b16 %v312, %v308
    %v393 = vpack.c.b16 %v317, %v313
    %v394 = vpack.c.b16 %v318, %v314
    %v395 = vpack.c.b16 %v319, %v315
    %v396 = vpack.c.b16 %v320, %v316
    %v397 = vpack.c.b16 %v325, %v321
    %v398 = vpack.c.b16 %v326, %v322
    %v399 = vpack.c.b16 %v327, %v323
    %v400 = vpack.c.b16 %v328, %v324
    %v401 = vpack.c.b16 %v333, %v329
    %v402 = vpack.c.b16 %v334, %v330
    %v403 = vpack.c.b16 %v335, %v331
    %v404 = vpack.c.b16 %v336, %v332
    %v405 = vpack.c.b16 %v341, %v337
    %v406 = vpack.c.b16 %v342, %v338
    %v407 = vpack.c.b16 %v343, %v339
    %v408 = vpack.c.b16 %v344, %v340
    %473 = vmatprep.subr.bf16.mxu0 %v346
    %474 = vmatpush1.bf16.msra.mxu0 %v345
    %475 = vmatprep.subr.bf16.mxu0 %v350
    %476 = vmatpush1.bf16.msra.mxu0 %v349
    %477 = vmatprep.subr.bf16.mxu0 %v354
    %478 = vmatpush1.bf16.msra.mxu0 %v353
    %479 = vmatprep.subr.bf16.mxu0 %v358
    %480 = vmatpush1.bf16.msra.mxu0 %v357
    %481 = vmatprep.subr.bf16.mxu0 %v362
    %482 = vmatpush1.bf16.msra.mxu0 %v361
    %483 = vmatprep.subr.bf16.mxu0 %v366
    %484 = vmatpush1.bf16.msra.mxu0 %v365
    %485 = vmatprep.subr.bf16.mxu0 %v370
    %486 = vmatpush1.bf16.msra.mxu0 %v369
    %487 = vmatprep.subr.bf16.mxu0 %v374
    %488 = vmatpush1.bf16.msra.mxu0 %v373
    %489 = vmatprep.subr.bf16.mxu0 %v378
    %490 = vmatpush1.bf16.msra.mxu0 %v377
    %491 = vmatprep.subr.bf16.mxu0 %v382
    %492 = vmatpush1.bf16.msra.mxu0 %v381
    %493 = vmatprep.subr.bf16.mxu0 %v386
    %494 = vmatpush1.bf16.msra.mxu0 %v385
    %495 = vmatprep.subr.bf16.mxu0 %v390
    %496 = vmatpush1.bf16.msra.mxu0 %v389
    %497 = vmatprep.subr.bf16.mxu0 %v394
    %498 = vmatpush1.bf16.msra.mxu0 %v393
    %499 = vmatprep.subr.bf16.mxu0 %v398
    %500 = vmatpush1.bf16.msra.mxu0 %v397
    %501 = vmatprep.subr.bf16.mxu0 %v402
    %502 = vmatpush1.bf16.msra.mxu0 %v401
    %503 = vmatprep.subr.bf16.mxu0 %v406
    %504 = vmatpush1.bf16.msra.mxu0 %v405
    %505 = vmatprep.mubr.bf16.mxu0 %v150
    %506 = vmatmul.mubr.bf16.gmra.mrb[0].mxu0 %v149
    %v507 = vpop.f32.mrb[0].mxu0
    %v508 = vadd.f32 0.0, %v507
    %v509 = vpop.f32.mrb[0].mxu0
    %v510 = vadd.f32 0.0, %v509
    %v511 = vpop.f32.mrb[0].mxu0
    %v512 = vadd.f32 0.0, %v511
    %v513 = vpop.f32.mrb[0].mxu0
    %v514 = vadd.f32 0.0, %v513
    %515 = vdwg.mxu0
    %516 = vmatprep.subr.bf16.mxu0 %v348
    %517 = vmatpush1.bf16.msra.mxu0 %v347
    %518 = vmatprep.subr.bf16.mxu0 %v352
    %519 = vmatpush1.bf16.msra.mxu0 %v351
    %520 = vmatprep.subr.bf16.mxu0 %v356
    %521 = vmatpush1.bf16.msra.mxu0 %v355
    %522 = vmatprep.subr.bf16.mxu0 %v360
    %523 = vmatpush1.bf16.msra.mxu0 %v359
    %524 = vmatprep.subr.bf16.mxu0 %v364
    %525 = vmatpush1.bf16.msra.mxu0 %v363
    %526 = vmatprep.subr.bf16.mxu0 %v368
    %527 = vmatpush1.bf16.msra.mxu0 %v367
    %528 = vmatprep.subr.bf16.mxu0 %v372
    %529 = vmatpush1.bf16.msra.mxu0 %v371
    %530 = vmatprep.subr.bf16.mxu0 %v376
    %531 = vmatpush1.bf16.msra.mxu0 %v375
    %532 = vmatprep.subr.bf16.mxu0 %v380
    %533 = vmatpush1.bf16.msra.mxu0 %v379
    %534 = vmatprep.subr.bf16.mxu0 %v384
    %535 = vmatpush1.bf16.msra.mxu0 %v383
    %536 = vmatprep.subr.bf16.mxu0 %v388
    %537 = vmatpush1.bf16.msra.mxu0 %v387
    %538 = vmatprep.subr.bf16.mxu0 %v392
    %539 = vmatpush1.bf16.msra.mxu0 %v391
    %540 = vmatprep.subr.bf16.mxu0 %v396
    %541 = vmatpush1.bf16.msra.mxu0 %v395
    %542 = vmatprep.subr.bf16.mxu0 %v400
    %543 = vmatpush1.bf16.msra.mxu0 %v399
    %544 = vmatprep.subr.bf16.mxu0 %v404
    %545 = vmatpush1.bf16.msra.mxu0 %v403
    %546 = vmatprep.subr.bf16.mxu0 %v408
    %547 = vmatpush1.bf16.msra.mxu0 %v407
    %548 = vmatprep.mubr.bf16.mxu0 %v150
    %549 = vmatmul.mubr.bf16.gmra.mrb[0].mxu0 %v149
    %v550 = vpop.f32.mrb[0].mxu0
    %v551 = vadd.f32 0.0, %v550
    %v552 = vpop.f32.mrb[0].mxu0
    %v553 = vadd.f32 0.0, %v552
    %v554 = vpop.f32.mrb[0].mxu0
    %v555 = vadd.f32 0.0, %v554
    %v556 = vpop.f32.mrb[0].mxu0
    %v557 = vadd.f32 0.0, %v556
    %558 = vdwg.mxu0
    %v559 = vld [vmem:[#allocation5] sm:$0xff]
    %v560 = vld [vmem:[#allocation5 + $0x8] sm:$0xff]
    %v561 = vld [vmem:[#allocation5 + $0x10] sm:$0xff]
    %v562 = vld [vmem:[#allocation5 + $0x18] sm:$0xff]
    %v563 = vld [vmem:[#allocation5 + $0x20] sm:$0xff]
    %v564 = vld [vmem:[#allocation5 + $0x28] sm:$0xff]
    %v565 = vld [vmem:[#allocation5 + $0x30] sm:$0xff]
    %v566 = vld [vmem:[#allocation5 + $0x38] sm:$0xff]
    %v567 = vld [vmem:[#allocation5 + $0x40] sm:$0xff]
    %v568 = vld [vmem:[#allocation5 + $0x48] sm:$0xff]
    %v569 = vld [vmem:[#allocation5 + $0x50] sm:$0xff]
    %v570 = vld [vmem:[#allocation5 + $0x58] sm:$0xff]
    %v571 = vld [vmem:[#allocation5 + $0x60] sm:$0xff]
    %v572 = vld [vmem:[#allocation5 + $0x68] sm:$0xff]
    %v573 = vld [vmem:[#allocation5 + $0x70] sm:$0xff]
    %v574 = vld [vmem:[#allocation5 + $0x78] sm:$0xff]
    %v575 = vld [vmem:[#allocation5 + $0x80] sm:$0xff]
    %v576 = vld [vmem:[#allocation5 + $0x88] sm:$0xff]
    %v577 = vld [vmem:[#allocation5 + $0x90] sm:$0xff]
    %v578 = vld [vmem:[#allocation5 + $0x98] sm:$0xff]
    %v579 = vld [vmem:[#allocation5 + $0xa0] sm:$0xff]
    %v580 = vld [vmem:[#allocation5 + $0xa8] sm:$0xff]
    %v581 = vld [vmem:[#allocation5 + $0xb0] sm:$0xff]
    %v582 = vld [vmem:[#allocation5 + $0xb8] sm:$0xff]
    %v583 = vld [vmem:[#allocation5 + $0xc0] sm:$0xff]
    %v584 = vld [vmem:[#allocation5 + $0xc8] sm:$0xff]
    %v585 = vld [vmem:[#allocation5 + $0xd0] sm:$0xff]
    %v586 = vld [vmem:[#allocation5 + $0xd8] sm:$0xff]
    %v587 = vld [vmem:[#allocation5 + $0xe0] sm:$0xff]
    %v588 = vld [vmem:[#allocation5 + $0xe8] sm:$0xff]
    %v589 = vld [vmem:[#allocation5 + $0xf0] sm:$0xff]
    %v590 = vld [vmem:[#allocation5 + $0xf8] sm:$0xff]
    %v591 = vld [vmem:[#allocation5 + $0x100] sm:$0xff]
    %v592 = vld [vmem:[#allocation5 + $0x108] sm:$0xff]
    %v593 = vld [vmem:[#allocation5 + $0x110] sm:$0xff]
    %v594 = vld [vmem:[#allocation5 + $0x118] sm:$0xff]
    %v595 = vld [vmem:[#allocation5 + $0x120] sm:$0xff]
    %v596 = vld [vmem:[#allocation5 + $0x128] sm:$0xff]
    %v597 = vld [vmem:[#allocation5 + $0x130] sm:$0xff]
    %v598 = vld [vmem:[#allocation5 + $0x138] sm:$0xff]
    %v599 = vld [vmem:[#allocation5 + $0x140] sm:$0xff]
    %v600 = vld [vmem:[#allocation5 + $0x148] sm:$0xff]
    %v601 = vld [vmem:[#allocation5 + $0x150] sm:$0xff]
    %v602 = vld [vmem:[#allocation5 + $0x158] sm:$0xff]
    %v603 = vld [vmem:[#allocation5 + $0x160] sm:$0xff]
    %v604 = vld [vmem:[#allocation5 + $0x168] sm:$0xff]
    %v605 = vld [vmem:[#allocation5 + $0x170] sm:$0xff]
    %v606 = vld [vmem:[#allocation5 + $0x178] sm:$0xff]
    %v607 = vld [vmem:[#allocation5 + $0x180] sm:$0xff]
    %v608 = vld [vmem:[#allocation5 + $0x188] sm:$0xff]
    %v609 = vld [vmem:[#allocation5 + $0x190] sm:$0xff]
    %v610 = vld [vmem:[#allocation5 + $0x198] sm:$0xff]
    %v611 = vld [vmem:[#allocation5 + $0x1a0] sm:$0xff]
    %v612 = vld [vmem:[#allocation5 + $0x1a8] sm:$0xff]
    %v613 = vld [vmem:[#allocation5 + $0x1b0] sm:$0xff]
    %v614 = vld [vmem:[#allocation5 + $0x1b8] sm:$0xff]
    %v615 = vld [vmem:[#allocation5 + $0x1c0] sm:$0xff]
    %v616 = vld [vmem:[#allocation5 + $0x1c8] sm:$0xff]
    %v617 = vld [vmem:[#allocation5 + $0x1d0] sm:$0xff]
    %v618 = vld [vmem:[#allocation5 + $0x1d8] sm:$0xff]
    %v619 = vld [vmem:[#allocation5 + $0x1e0] sm:$0xff]
    %v620 = vld [vmem:[#allocation5 + $0x1e8] sm:$0xff]
    %v621 = vld [vmem:[#allocation5 + $0x1f0] sm:$0xff]
    %v622 = vld [vmem:[#allocation5 + $0x1f8] sm:$0xff]
    %v687 = vunpack.c.l.b16 %v559
    %v688 = vunpack.c.h.b16 %v559
    %v689 = vunpack.c.l.b16 %v560
    %v690 = vunpack.c.h.b16 %v560
    %v691 = vunpack.c.l.b16 %v561
    %v692 = vunpack.c.h.b16 %v561
    %v693 = vunpack.c.l.b16 %v562
    %v694 = vunpack.c.h.b16 %v562
    %v695 = vunpack.c.l.b16 %v563
    %v696 = vunpack.c.h.b16 %v563
    %v697 = vunpack.c.l.b16 %v564
    %v698 = vunpack.c.h.b16 %v564
    %v699 = vunpack.c.l.b16 %v565
    %v700 = vunpack.c.h.b16 %v565
    %v701 = vunpack.c.l.b16 %v566
    %v702 = vunpack.c.h.b16 %v566
    %v703 = vunpack.c.l.b16 %v567
    %v704 = vunpack.c.h.b16 %v567
    %v705 = vunpack.c.l.b16 %v568
    %v706 = vunpack.c.h.b16 %v568
    %v707 = vunpack.c.l.b16 %v569
    %v708 = vunpack.c.h.b16 %v569
    %v709 = vunpack.c.l.b16 %v570
    %v710 = vunpack.c.h.b16 %v570
    %v711 = vunpack.c.l.b16 %v571
    %v712 = vunpack.c.h.b16 %v571
    %v713 = vunpack.c.l.b16 %v572
    %v714 = vunpack.c.h.b16 %v572
    %v715 = vunpack.c.l.b16 %v573
    %v716 = vunpack.c.h.b16 %v573
    %v717 = vunpack.c.l.b16 %v574
    %v718 = vunpack.c.h.b16 %v574
    %v719 = vunpack.c.l.b16 %v575
    %v720 = vunpack.c.h.b16 %v575
    %v721 = vunpack.c.l.b16 %v576
    %v722 = vunpack.c.h.b16 %v576
    %v723 = vunpack.c.l.b16 %v577
    %v724 = vunpack.c.h.b16 %v577
    %v725 = vunpack.c.l.b16 %v578
    %v726 = vunpack.c.h.b16 %v578
    %v727 = vunpack.c.l.b16 %v579
    %v728 = vunpack.c.h.b16 %v579
    %v729 = vunpack.c.l.b16 %v580
    %v730 = vunpack.c.h.b16 %v580
    %v731 = vunpack.c.l.b16 %v581
    %v732 = vunpack.c.h.b16 %v581
    %v733 = vunpack.c.l.b16 %v582
    %v734 = vunpack.c.h.b16 %v582
    %v735 = vunpack.c.l.b16 %v583
    %v736 = vunpack.c.h.b16 %v583
    %v737 = vunpack.c.l.b16 %v584
    %v738 = vunpack.c.h.b16 %v584
    %v739 = vunpack.c.l.b16 %v585
    %v740 = vunpack.c.h.b16 %v585
    %v741 = vunpack.c.l.b16 %v586
    %v742 = vunpack.c.h.b16 %v586
    %v743 = vunpack.c.l.b16 %v587
    %v744 = vunpack.c.h.b16 %v587
    %v745 = vunpack.c.l.b16 %v588
    %v746 = vunpack.c.h.b16 %v588
    %v747 = vunpack.c.l.b16 %v589
    %v748 = vunpack.c.h.b16 %v589
    %v749 = vunpack.c.l.b16 %v590
    %v750 = vunpack.c.h.b16 %v590
    %v751 = vunpack.c.l.b16 %v591
    %v752 = vunpack.c.h.b16 %v591
    %v753 = vunpack.c.l.b16 %v592
    %v754 = vunpack.c.h.b16 %v592
    %v755 = vunpack.c.l.b16 %v593
    %v756 = vunpack.c.h.b16 %v593
    %v757 = vunpack.c.l.b16 %v594
    %v758 = vunpack.c.h.b16 %v594
    %v759 = vunpack.c.l.b16 %v595
    %v760 = vunpack.c.h.b16 %v595
    %v761 = vunpack.c.l.b16 %v596
    %v762 = vunpack.c.h.b16 %v596
    %v763 = vunpack.c.l.b16 %v597
    %v764 = vunpack.c.h.b16 %v597
    %v765 = vunpack.c.l.b16 %v598
    %v766 = vunpack.c.h.b16 %v598
    %v767 = vunpack.c.l.b16 %v599
    %v768 = vunpack.c.h.b16 %v599
    %v769 = vunpack.c.l.b16 %v600
    %v770 = vunpack.c.h.b16 %v600
    %v771 = vunpack.c.l.b16 %v601
    %v772 = vunpack.c.h.b16 %v601
    %v773 = vunpack.c.l.b16 %v602
    %v774 = vunpack.c.h.b16 %v602
    %v775 = vunpack.c.l.b16 %v603
    %v776 = vunpack.c.h.b16 %v603
    %v777 = vunpack.c.l.b16 %v604
    %v778 = vunpack.c.h.b16 %v604
    %v779 = vunpack.c.l.b16 %v605
    %v780 = vunpack.c.h.b16 %v605
    %v781 = vunpack.c.l.b16 %v606
    %v782 = vunpack.c.h.b16 %v606
    %v783 = vunpack.c.l.b16 %v607
    %v784 = vunpack.c.h.b16 %v607
    %v785 = vunpack.c.l.b16 %v608
    %v786 = vunpack.c.h.b16 %v608
    %v787 = vunpack.c.l.b16 %v609
    %v788 = vunpack.c.h.b16 %v609
    %v789 = vunpack.c.l.b16 %v610
    %v790 = vunpack.c.h.b16 %v610
    %v791 = vunpack.c.l.b16 %v611
    %v792 = vunpack.c.h.b16 %v611
    %v793 = vunpack.c.l.b16 %v612
    %v794 = vunpack.c.h.b16 %v612
    %v795 = vunpack.c.l.b16 %v613
    %v796 = vunpack.c.h.b16 %v613
    %v797 = vunpack.c.l.b16 %v614
    %v798 = vunpack.c.h.b16 %v614
    %v799 = vunpack.c.l.b16 %v615
    %v800 = vunpack.c.h.b16 %v615
    %v801 = vunpack.c.l.b16 %v616
    %v802 = vunpack.c.h.b16 %v616
    %v803 = vunpack.c.l.b16 %v617
    %v804 = vunpack.c.h.b16 %v617
    %v805 = vunpack.c.l.b16 %v618
    %v806 = vunpack.c.h.b16 %v618
    %v807 = vunpack.c.l.b16 %v619
    %v808 = vunpack.c.h.b16 %v619
    %v809 = vunpack.c.l.b16 %v620
    %v810 = vunpack.c.h.b16 %v620
    %v811 = vunpack.c.l.b16 %v621
    %v812 = vunpack.c.h.b16 %v621
    %v813 = vunpack.c.l.b16 %v622
    %v814 = vunpack.c.h.b16 %v622
    %v815 = vpack.c.b16 %v691, %v687
    %v816 = vpack.c.b16 %v692, %v688
    %v817 = vpack.c.b16 %v693, %v689
    %v818 = vpack.c.b16 %v694, %v690
    %v819 = vpack.c.b16 %v699, %v695
    %v820 = vpack.c.b16 %v700, %v696
    %v821 = vpack.c.b16 %v701, %v697
    %v822 = vpack.c.b16 %v702, %v698
    %v823 = vpack.c.b16 %v707, %v703
    %v824 = vpack.c.b16 %v708, %v704
    %v825 = vpack.c.b16 %v709, %v705
    %v826 = vpack.c.b16 %v710, %v706
    %v827 = vpack.c.b16 %v715, %v711
    %v828 = vpack.c.b16 %v716, %v712
    %v829 = vpack.c.b16 %v717, %v713
    %v830 = vpack.c.b16 %v718, %v714
    %v831 = vpack.c.b16 %v723, %v719
    %v832 = vpack.c.b16 %v724, %v720
    %v833 = vpack.c.b16 %v725, %v721
    %v834 = vpack.c.b16 %v726, %v722
    %v835 = vpack.c.b16 %v731, %v727
    %v836 = vpack.c.b16 %v732, %v728
    %v837 = vpack.c.b16 %v733, %v729
    %v838 = vpack.c.b16 %v734, %v730
    %v839 = vpack.c.b16 %v739, %v735
    %v840 = vpack.c.b16 %v740, %v736
    %v841 = vpack.c.b16 %v741, %v737
    %v842 = vpack.c.b16 %v742, %v738
    %v843 = vpack.c.b16 %v747, %v743
    %v844 = vpack.c.b16 %v748, %v744
    %v845 = vpack.c.b16 %v749, %v745
    %v846 = vpack.c.b16 %v750, %v746
    %v847 = vpack.c.b16 %v755, %v751
    %v848 = vpack.c.b16 %v756, %v752
    %v849 = vpack.c.b16 %v757, %v753
    %v850 = vpack.c.b16 %v758, %v754
    %v851 = vpack.c.b16 %v763, %v759
    %v852 = vpack.c.b16 %v764, %v760
    %v853 = vpack.c.b16 %v765, %v761
    %v854 = vpack.c.b16 %v766, %v762
    %v855 = vpack.c.b16 %v771, %v767
    %v856 = vpack.c.b16 %v772, %v768
    %v857 = vpack.c.b16 %v773, %v769
    %v858 = vpack.c.b16 %v774, %v770
    %v859 = vpack.c.b16 %v779, %v775
    %v860 = vpack.c.b16 %v780, %v776
    %v861 = vpack.c.b16 %v781, %v777
    %v862 = vpack.c.b16 %v782, %v778
    %v863 = vpack.c.b16 %v787, %v783
    %v864 = vpack.c.b16 %v788, %v784
    %v865 = vpack.c.b16 %v789, %v785
    %v866 = vpack.c.b16 %v790, %v786
    %v867 = vpack.c.b16 %v795, %v791
    %v868 = vpack.c.b16 %v796, %v792
    %v869 = vpack.c.b16 %v797, %v793
    %v870 = vpack.c.b16 %v798, %v794
    %v871 = vpack.c.b16 %v803, %v799
    %v872 = vpack.c.b16 %v804, %v800
    %v873 = vpack.c.b16 %v805, %v801
    %v874 = vpack.c.b16 %v806, %v802
    %v875 = vpack.c.b16 %v811, %v807
    %v876 = vpack.c.b16 %v812, %v808
    %v877 = vpack.c.b16 %v813, %v809
    %v878 = vpack.c.b16 %v814, %v810
    %943 = vmatprep.subr.bf16.mxu0 %v816
    %944 = vmatpush1.bf16.msra.mxu0 %v815
    %945 = vmatprep.subr.bf16.mxu0 %v820
    %946 = vmatpush1.bf16.msra.mxu0 %v819
    %947 = vmatprep.subr.bf16.mxu0 %v824
    %948 = vmatpush1.bf16.msra.mxu0 %v823
    %949 = vmatprep.subr.bf16.mxu0 %v828
    %950 = vmatpush1.bf16.msra.mxu0 %v827
    %951 = vmatprep.subr.bf16.mxu0 %v832
    %952 = vmatpush1.bf16.msra.mxu0 %v831
    %953 = vmatprep.subr.bf16.mxu0 %v836
    %954 = vmatpush1.bf16.msra.mxu0 %v835
    %955 = vmatprep.subr.bf16.mxu0 %v840
    %956 = vmatpush1.bf16.msra.mxu0 %v839
    %957 = vmatprep.subr.bf16.mxu0 %v844
    %958 = vmatpush1.bf16.msra.mxu0 %v843
    %959 = vmatprep.subr.bf16.mxu0 %v848
    %960 = vmatpush1.bf16.msra.mxu0 %v847
    %961 = vmatprep.subr.bf16.mxu0 %v852
    %962 = vmatpush1.bf16.msra.mxu0 %v851
    %963 = vmatprep.subr.bf16.mxu0 %v856
    %964 = vmatpush1.bf16.msra.mxu0 %v855
    %965 = vmatprep.subr.bf16.mxu0 %v860
    %966 = vmatpush1.bf16.msra.mxu0 %v859
    %967 = vmatprep.subr.bf16.mxu0 %v864
    %968 = vmatpush1.bf16.msra.mxu0 %v863
    %969 = vmatprep.subr.bf16.mxu0 %v868
    %970 = vmatpush1.bf16.msra.mxu0 %v867
    %971 = vmatprep.subr.bf16.mxu0 %v872
    %972 = vmatpush1.bf16.msra.mxu0 %v871
    %973 = vmatprep.subr.bf16.mxu0 %v876
    %974 = vmatpush1.bf16.msra.mxu0 %v875
    %975 = vmatprep.mubr.bf16.mxu0 %v150
    %976 = vmatmul.mubr.bf16.gmra.mrb[0].mxu0 %v149
    %v977 = vpop.f32.mrb[0].mxu0
    %v978 = vadd.f32 0.0, %v977
    %v979 = vpop.f32.mrb[0].mxu0
    %v980 = vadd.f32 0.0, %v979
    %v981 = vpop.f32.mrb[0].mxu0
    %v982 = vadd.f32 0.0, %v981
    %v983 = vpop.f32.mrb[0].mxu0
    %v984 = vadd.f32 0.0, %v983
    %985 = vdwg.mxu0
    %986 = vmatprep.subr.bf16.mxu0 %v818
    %987 = vmatpush1.bf16.msra.mxu0 %v817
    %988 = vmatprep.subr.bf16.mxu0 %v822
    %989 = vmatpush1.bf16.msra.mxu0 %v821
    %990 = vmatprep.subr.bf16.mxu0 %v826
    %991 = vmatpush1.bf16.msra.mxu0 %v825
    %992 = vmatprep.subr.bf16.mxu0 %v830
    %993 = vmatpush1.bf16.msra.mxu0 %v829
    %994 = vmatprep.subr.bf16.mxu0 %v834
    %995 = vmatpush1.bf16.msra.mxu0 %v833
    %996 = vmatprep.subr.bf16.mxu0 %v838
    %997 = vmatpush1.bf16.msra.mxu0 %v837
    %998 = vmatprep.subr.bf16.mxu0 %v842
    %999 = vmatpush1.bf16.msra.mxu0 %v841
    %1000 = vmatprep.subr.bf16.mxu0 %v846
    %1001 = vmatpush1.bf16.msra.mxu0 %v845
    %1002 = vmatprep.subr.bf16.mxu0 %v850
    %1003 = vmatpush1.bf16.msra.mxu0 %v849
    %1004 = vmatprep.subr.bf16.mxu0 %v854
    %1005 = vmatpush1.bf16.msra.mxu0 %v853
    %1006 = vmatprep.subr.bf16.mxu0 %v858
    %1007 = vmatpush1.bf16.msra.mxu0 %v857
    %1008 = vmatprep.subr.bf16.mxu0 %v862
    %1009 = vmatpush1.bf16.msra.mxu0 %v861
    %1010 = vmatprep.subr.bf16.mxu0 %v866
    %1011 = vmatpush1.bf16.msra.mxu0 %v865
    %1012 = vmatprep.subr.bf16.mxu0 %v870
    %1013 = vmatpush1.bf16.msra.mxu0 %v869
    %1014 = vmatprep.subr.bf16.mxu0 %v874
    %1015 = vmatpush1.bf16.msra.mxu0 %v873
    %1016 = vmatprep.subr.bf16.mxu0 %v878
    %1017 = vmatpush1.bf16.msra.mxu0 %v877
    %1018 = vmatprep.mubr.bf16.mxu0 %v150
    %1019 = vmatmul.mubr.bf16.gmra.mrb[0].mxu0 %v149
    %v1020 = vpop.f32.mrb[0].mxu0
    %v1021 = vadd.f32 0.0, %v1020
    %v1022 = vpop.f32.mrb[0].mxu0
    %v1023 = vadd.f32 0.0, %v1022
    %v1024 = vpop.f32.mrb[0].mxu0
    %v1025 = vadd.f32 0.0, %v1024
    %v1026 = vpop.f32.mrb[0].mxu0
    %v1027 = vadd.f32 0.0, %v1026
    %1028 = vdwg.mxu0
    %v1029 = vxor.u32 %v508, 2147483648
    %v1030 = vxor.u32 %v510, 2147483648
    %v1031 = vxor.u32 %v551, 2147483648
    %v1032 = vxor.u32 %v553, 2147483648
    %v1033 = vxor.u32 %v512, 2147483648
    %v1034 = vxor.u32 %v514, 2147483648
    %v1035 = vxor.u32 %v555, 2147483648
    %v1036 = vxor.u32 %v557, 2147483648
    %v1037 = vmul.f32 %v1029, 1.442695
    %v1038 = vpow.pop %v1037
    %v1039 = vmul.f32 %v1030, 1.442695
    %v1040 = vpow.pop %v1039
    %v1041 = vmul.f32 %v1031, 1.442695
    %v1042 = vpow.pop %v1041
    %v1043 = vmul.f32 %v1032, 1.442695
    %v1044 = vpow.pop %v1043
    %v1045 = vmul.f32 %v1033, 1.442695
    %v1046 = vpow.pop %v1045
    %v1047 = vmul.f32 %v1034, 1.442695
    %v1048 = vpow.pop %v1047
    %v1049 = vmul.f32 %v1035, 1.442695
    %v1050 = vpow.pop %v1049
    %v1051 = vmul.f32 %v1036, 1.442695
    %v1052 = vpow.pop %v1051
    %v1053 = vadd.f32 %v1038, 1.0
    %v1054 = vadd.f32 %v1040, 1.0
    %v1055 = vadd.f32 %v1042, 1.0
    %v1056 = vadd.f32 %v1044, 1.0
    %v1057 = vadd.f32 %v1046, 1.0
    %v1058 = vadd.f32 %v1048, 1.0
    %v1059 = vadd.f32 %v1050, 1.0
    %v1060 = vadd.f32 %v1052, 1.0
    %v1061 = vrcp.pop %v1053
    %v1062 = vmul.f32 1.0, %v1061
    %v1063 = vrcp.pop %v1054
    %v1064 = vmul.f32 1.0, %v1063
    %v1065 = vrcp.pop %v1055
    %v1066 = vmul.f32 1.0, %v1065
    %v1067 = vrcp.pop %v1056
    %v1068 = vmul.f32 1.0, %v1067
    %v1069 = vrcp.pop %v1057
    %v1070 = vmul.f32 1.0, %v1069
    %v1071 = vrcp.pop %v1058
    %v1072 = vmul.f32 1.0, %v1071
    %v1073 = vrcp.pop %v1059
    %v1074 = vmul.f32 1.0, %v1073
    %v1075 = vrcp.pop %v1060
    %v1076 = vmul.f32 1.0, %v1075
    %v1077 = vmul.f32 %v508, %v1062
    %v1078 = vmul.f32 %v510, %v1064
    %v1079 = vmul.f32 %v551, %v1066
    %v1080 = vmul.f32 %v553, %v1068
    %v1081 = vmul.f32 %v512, %v1070
    %v1082 = vmul.f32 %v514, %v1072
    %v1083 = vmul.f32 %v555, %v1074
    %v1084 = vmul.f32 %v557, %v1076
    %v1085 = vmul.f32 %v1077, %v978
    %v1086 = vmul.f32 %v1078, %v980
    %v1087 = vmul.f32 %v1079, %v1021
    %v1088 = vmul.f32 %v1080, %v1023
    %v1089 = vmul.f32 %v1081, %v982
    %v1090 = vmul.f32 %v1082, %v984
    %v1091 = vmul.f32 %v1083, %v1025
    %v1092 = vmul.f32 %v1084, %v1027
    %v1093 = vpack.c.bf16 %v1089, %v1085
    %v1094 = vpack.c.bf16 %v1090, %v1086
    %v1095 = vpack.c.bf16 %v1091, %v1087
    %v1096 = vpack.c.bf16 %v1092, %v1088
    %v1097 = vld [vmem:[#allocation7] sm:$0xff]
    %v1098 = vld [vmem:[#allocation7 + $0x8] sm:$0xff]
    %v1099 = vld [vmem:[#allocation7 + $0x10] sm:$0xff]
    %v1100 = vld [vmem:[#allocation7 + $0x18] sm:$0xff]
    %v1101 = vld [vmem:[#allocation7 + $0x20] sm:$0xff]
    %v1102 = vld [vmem:[#allocation7 + $0x28] sm:$0xff]
    %v1103 = vld [vmem:[#allocation7 + $0x30] sm:$0xff]
    %v1104 = vld [vmem:[#allocation7 + $0x38] sm:$0xff]
    %v1105 = vld [vmem:[#allocation7 + $0x40] sm:$0xff]
    %v1106 = vld [vmem:[#allocation7 + $0x48] sm:$0xff]
    %v1107 = vld [vmem:[#allocation7 + $0x50] sm:$0xff]
    %v1108 = vld [vmem:[#allocation7 + $0x58] sm:$0xff]
    %v1109 = vld [vmem:[#allocation7 + $0x60] sm:$0xff]
    %v1110 = vld [vmem:[#allocation7 + $0x68] sm:$0xff]
    %v1111 = vld [vmem:[#allocation7 + $0x70] sm:$0xff]
    %v1112 = vld [vmem:[#allocation7 + $0x78] sm:$0xff]
    %v1113 = vld [vmem:[#allocation7 + $0x80] sm:$0xff]
    %v1114 = vld [vmem:[#allocation7 + $0x88] sm:$0xff]
    %v1115 = vld [vmem:[#allocation7 + $0x90] sm:$0xff]
    %v1116 = vld [vmem:[#allocation7 + $0x98] sm:$0xff]
    %v1117 = vld [vmem:[#allocation7 + $0xa0] sm:$0xff]
    %v1118 = vld [vmem:[#allocation7 + $0xa8] sm:$0xff]
    %v1119 = vld [vmem:[#allocation7 + $0xb0] sm:$0xff]
    %v1120 = vld [vmem:[#allocation7 + $0xb8] sm:$0xff]
    %v1121 = vld [vmem:[#allocation7 + $0xc0] sm:$0xff]
    %v1122 = vld [vmem:[#allocation7 + $0xc8] sm:$0xff]
    %v1123 = vld [vmem:[#allocation7 + $0xd0] sm:$0xff]
    %v1124 = vld [vmem:[#allocation7 + $0xd8] sm:$0xff]
    %v1125 = vld [vmem:[#allocation7 + $0xe0] sm:$0xff]
    %v1126 = vld [vmem:[#allocation7 + $0xe8] sm:$0xff]
    %v1127 = vld [vmem:[#allocation7 + $0xf0] sm:$0xff]
    %v1128 = vld [vmem:[#allocation7 + $0xf8] sm:$0xff]
    %v1129 = vld [vmem:[#allocation7 + $0x100] sm:$0xff]
    %v1130 = vld [vmem:[#allocation7 + $0x108] sm:$0xff]
    %v1131 = vld [vmem:[#allocation7 + $0x110] sm:$0xff]
    %v1132 = vld [vmem:[#allocation7 + $0x118] sm:$0xff]
    %v1133 = vld [vmem:[#allocation7 + $0x120] sm:$0xff]
    %v1134 = vld [vmem:[#allocation7 + $0x128] sm:$0xff]
    %v1135 = vld [vmem:[#allocation7 + $0x130] sm:$0xff]
    %v1136 = vld [vmem:[#allocation7 + $0x138] sm:$0xff]
    %v1137 = vld [vmem:[#allocation7 + $0x140] sm:$0xff]
    %v1138 = vld [vmem:[#allocation7 + $0x148] sm:$0xff]
    %v1139 = vld [vmem:[#allocation7 + $0x150] sm:$0xff]
    %v1140 = vld [vmem:[#allocation7 + $0x158] sm:$0xff]
    %v1141 = vld [vmem:[#allocation7 + $0x160] sm:$0xff]
    %v1142 = vld [vmem:[#allocation7 + $0x168] sm:$0xff]
    %v1143 = vld [vmem:[#allocation7 + $0x170] sm:$0xff]
    %v1144 = vld [vmem:[#allocation7 + $0x178] sm:$0xff]
    %v1145 = vld [vmem:[#allocation7 + $0x180] sm:$0xff]
    %v1146 = vld [vmem:[#allocation7 + $0x188] sm:$0xff]
    %v1147 = vld [vmem:[#allocation7 + $0x190] sm:$0xff]
    %v1148 = vld [vmem:[#allocation7 + $0x198] sm:$0xff]
    %v1149 = vld [vmem:[#allocation7 + $0x1a0] sm:$0xff]
    %v1150 = vld [vmem:[#allocation7 + $0x1a8] sm:$0xff]
    %v1151 = vld [vmem:[#allocation7 + $0x1b0] sm:$0xff]
    %v1152 = vld [vmem:[#allocation7 + $0x1b8] sm:$0xff]
    %v1153 = vld [vmem:[#allocation7 + $0x1c0] sm:$0xff]
    %v1154 = vld [vmem:[#allocation7 + $0x1c8] sm:$0xff]
    %v1155 = vld [vmem:[#allocation7 + $0x1d0] sm:$0xff]
    %v1156 = vld [vmem:[#allocation7 + $0x1d8] sm:$0xff]
    %v1157 = vld [vmem:[#allocation7 + $0x1e0] sm:$0xff]
    %v1158 = vld [vmem:[#allocation7 + $0x1e8] sm:$0xff]
    %v1159 = vld [vmem:[#allocation7 + $0x1f0] sm:$0xff]
    %v1160 = vld [vmem:[#allocation7 + $0x1f8] sm:$0xff]
    %v1225 = vunpack.c.l.b16 %v1097
    %v1226 = vunpack.c.h.b16 %v1097
    %v1227 = vunpack.c.l.b16 %v1098
    %v1228 = vunpack.c.h.b16 %v1098
    %v1229 = vunpack.c.l.b16 %v1099
    %v1230 = vunpack.c.h.b16 %v1099
    %v1231 = vunpack.c.l.b16 %v1100
    %v1232 = vunpack.c.h.b16 %v1100
    %v1233 = vunpack.c.l.b16 %v1101
    %v1234 = vunpack.c.h.b16 %v1101
    %v1235 = vunpack.c.l.b16 %v1102
    %v1236 = vunpack.c.h.b16 %v1102
    %v1237 = vunpack.c.l.b16 %v1103
    %v1238 = vunpack.c.h.b16 %v1103
    %v1239 = vunpack.c.l.b16 %v1104
    %v1240 = vunpack.c.h.b16 %v1104
    %v1241 = vunpack.c.l.b16 %v1105
    %v1242 = vunpack.c.h.b16 %v1105
    %v1243 = vunpack.c.l.b16 %v1106
    %v1244 = vunpack.c.h.b16 %v1106
    %v1245 = vunpack.c.l.b16 %v1107
    %v1246 = vunpack.c.h.b16 %v1107
    %v1247 = vunpack.c.l.b16 %v1108
    %v1248 = vunpack.c.h.b16 %v1108
    %v1249 = vunpack.c.l.b16 %v1109
    %v1250 = vunpack.c.h.b16 %v1109
    %v1251 = vunpack.c.l.b16 %v1110
    %v1252 = vunpack.c.h.b16 %v1110
    %v1253 = vunpack.c.l.b16 %v1111
    %v1254 = vunpack.c.h.b16 %v1111
    %v1255 = vunpack.c.l.b16 %v1112
    %v1256 = vunpack.c.h.b16 %v1112
    %v1257 = vunpack.c.l.b16 %v1113
    %v1258 = vunpack.c.h.b16 %v1113
    %v1259 = vunpack.c.l.b16 %v1114
    %v1260 = vunpack.c.h.b16 %v1114
    %v1261 = vunpack.c.l.b16 %v1115
    %v1262 = vunpack.c.h.b16 %v1115
    %v1263 = vunpack.c.l.b16 %v1116
    %v1264 = vunpack.c.h.b16 %v1116
    %v1265 = vunpack.c.l.b16 %v1117
    %v1266 = vunpack.c.h.b16 %v1117
    %v1267 = vunpack.c.l.b16 %v1118
    %v1268 = vunpack.c.h.b16 %v1118
    %v1269 = vunpack.c.l.b16 %v1119
    %v1270 = vunpack.c.h.b16 %v1119
    %v1271 = vunpack.c.l.b16 %v1120
    %v1272 = vunpack.c.h.b16 %v1120
    %v1273 = vunpack.c.l.b16 %v1121
    %v1274 = vunpack.c.h.b16 %v1121
    %v1275 = vunpack.c.l.b16 %v1122
    %v1276 = vunpack.c.h.b16 %v1122
    %v1277 = vunpack.c.l.b16 %v1123
    %v1278 = vunpack.c.h.b16 %v1123
    %v1279 = vunpack.c.l.b16 %v1124
    %v1280 = vunpack.c.h.b16 %v1124
    %v1281 = vunpack.c.l.b16 %v1125
    %v1282 = vunpack.c.h.b16 %v1125
    %v1283 = vunpack.c.l.b16 %v1126
    %v1284 = vunpack.c.h.b16 %v1126
    %v1285 = vunpack.c.l.b16 %v1127
    %v1286 = vunpack.c.h.b16 %v1127
    %v1287 = vunpack.c.l.b16 %v1128
    %v1288 = vunpack.c.h.b16 %v1128
    %v1289 = vunpack.c.l.b16 %v1129
    %v1290 = vunpack.c.h.b16 %v1129
    %v1291 = vunpack.c.l.b16 %v1130
    %v1292 = vunpack.c.h.b16 %v1130
    %v1293 = vunpack.c.l.b16 %v1131
    %v1294 = vunpack.c.h.b16 %v1131
    %v1295 = vunpack.c.l.b16 %v1132
    %v1296 = vunpack.c.h.b16 %v1132
    %v1297 = vunpack.c.l.b16 %v1133
    %v1298 = vunpack.c.h.b16 %v1133
    %v1299 = vunpack.c.l.b16 %v1134
    %v1300 = vunpack.c.h.b16 %v1134
    %v1301 = vunpack.c.l.b16 %v1135
    %v1302 = vunpack.c.h.b16 %v1135
    %v1303 = vunpack.c.l.b16 %v1136
    %v1304 = vunpack.c.h.b16 %v1136
    %v1305 = vunpack.c.l.b16 %v1137
    %v1306 = vunpack.c.h.b16 %v1137
    %v1307 = vunpack.c.l.b16 %v1138
    %v1308 = vunpack.c.h.b16 %v1138
    %v1309 = vunpack.c.l.b16 %v1139
    %v1310 = vunpack.c.h.b16 %v1139
    %v1311 = vunpack.c.l.b16 %v1140
    %v1312 = vunpack.c.h.b16 %v1140
    %v1313 = vunpack.c.l.b16 %v1141
    %v1314 = vunpack.c.h.b16 %v1141
    %v1315 = vunpack.c.l.b16 %v1142
    %v1316 = vunpack.c.h.b16 %v1142
    %v1317 = vunpack.c.l.b16 %v1143
    %v1318 = vunpack.c.h.b16 %v1143
    %v1319 = vunpack.c.l.b16 %v1144
    %v1320 = vunpack.c.h.b16 %v1144
    %v1321 = vunpack.c.l.b16 %v1145
    %v1322 = vunpack.c.h.b16 %v1145
    %v1323 = vunpack.c.l.b16 %v1146
    %v1324 = vunpack.c.h.b16 %v1146
    %v1325 = vunpack.c.l.b16 %v1147
    %v1326 = vunpack.c.h.b16 %v1147
    %v1327 = vunpack.c.l.b16 %v1148
    %v1328 = vunpack.c.h.b16 %v1148
    %v1329 = vunpack.c.l.b16 %v1149
    %v1330 = vunpack.c.h.b16 %v1149
    %v1331 = vunpack.c.l.b16 %v1150
    %v1332 = vunpack.c.h.b16 %v1150
    %v1333 = vunpack.c.l.b16 %v1151
    %v1334 = vunpack.c.h.b16 %v1151
    %v1335 = vunpack.c.l.b16 %v1152
    %v1336 = vunpack.c.h.b16 %v1152
    %v1337 = vunpack.c.l.b16 %v1153
    %v1338 = vunpack.c.h.b16 %v1153
    %v1339 = vunpack.c.l.b16 %v1154
    %v1340 = vunpack.c.h.b16 %v1154
    %v1341 = vunpack.c.l.b16 %v1155
    %v1342 = vunpack.c.h.b16 %v1155
    %v1343 = vunpack.c.l.b16 %v1156
    %v1344 = vunpack.c.h.b16 %v1156
    %v1345 = vunpack.c.l.b16 %v1157
    %v1346 = vunpack.c.h.b16 %v1157
    %v1347 = vunpack.c.l.b16 %v1158
    %v1348 = vunpack.c.h.b16 %v1158
    %v1349 = vunpack.c.l.b16 %v1159
    %v1350 = vunpack.c.h.b16 %v1159
    %v1351 = vunpack.c.l.b16 %v1160
    %v1352 = vunpack.c.h.b16 %v1160
    %v1353 = vpack.c.b16 %v1227, %v1225
    %v1354 = vpack.c.b16 %v1228, %v1226
    %v1355 = vpack.c.b16 %v1231, %v1229
    %v1356 = vpack.c.b16 %v1232, %v1230
    %v1357 = vpack.c.b16 %v1235, %v1233
    %v1358 = vpack.c.b16 %v1236, %v1234
    %v1359 = vpack.c.b16 %v1239, %v1237
    %v1360 = vpack.c.b16 %v1240, %v1238
    %v1361 = vpack.c.b16 %v1243, %v1241
    %v1362 = vpack.c.b16 %v1244, %v1242
    %v1363 = vpack.c.b16 %v1247, %v1245
    %v1364 = vpack.c.b16 %v1248, %v1246
    %v1365 = vpack.c.b16 %v1251, %v1249
    %v1366 = vpack.c.b16 %v1252, %v1250
    %v1367 = vpack.c.b16 %v1255, %v1253
    %v1368 = vpack.c.b16 %v1256, %v1254
    %v1369 = vpack.c.b16 %v1259, %v1257
    %v1370 = vpack.c.b16 %v1260, %v1258
    %v1371 = vpack.c.b16 %v1263, %v1261
    %v1372 = vpack.c.b16 %v1264, %v1262
    %v1373 = vpack.c.b16 %v1267, %v1265
    %v1374 = vpack.c.b16 %v1268, %v1266
    %v1375 = vpack.c.b16 %v1271, %v1269
    %v1376 = vpack.c.b16 %v1272, %v1270
    %v1377 = vpack.c.b16 %v1275, %v1273
    %v1378 = vpack.c.b16 %v1276, %v1274
    %v1379 = vpack.c.b16 %v1279, %v1277
    %v1380 = vpack.c.b16 %v1280, %v1278
    %v1381 = vpack.c.b16 %v1283, %v1281
    %v1382 = vpack.c.b16 %v1284, %v1282
    %v1383 = vpack.c.b16 %v1287, %v1285
    %v1384 = vpack.c.b16 %v1288, %v1286
    %v1385 = vpack.c.b16 %v1291, %v1289
    %v1386 = vpack.c.b16 %v1292, %v1290
    %v1387 = vpack.c.b16 %v1295, %v1293
    %v1388 = vpack.c.b16 %v1296, %v1294
    %v1389 = vpack.c.b16 %v1299, %v1297
    %v1390 = vpack.c.b16 %v1300, %v1298
    %v1391 = vpack.c.b16 %v1303, %v1301
    %v1392 = vpack.c.b16 %v1304, %v1302
    %v1393 = vpack.c.b16 %v1307, %v1305
    %v1394 = vpack.c.b16 %v1308, %v1306
    %v1395 = vpack.c.b16 %v1311, %v1309
    %v1396 = vpack.c.b16 %v1312, %v1310
    %v1397 = vpack.c.b16 %v1315, %v1313
    %v1398 = vpack.c.b16 %v1316, %v1314
    %v1399 = vpack.c.b16 %v1319, %v1317
    %v1400 = vpack.c.b16 %v1320, %v1318
    %v1401 = vpack.c.b16 %v1323, %v1321
    %v1402 = vpack.c.b16 %v1324, %v1322
    %v1403 = vpack.c.b16 %v1327, %v1325
    %v1404 = vpack.c.b16 %v1328, %v1326
    %v1405 = vpack.c.b16 %v1331, %v1329
    %v1406 = vpack.c.b16 %v1332, %v1330
    %v1407 = vpack.c.b16 %v1335, %v1333
    %v1408 = vpack.c.b16 %v1336, %v1334
    %v1409 = vpack.c.b16 %v1339, %v1337
    %v1410 = vpack.c.b16 %v1340, %v1338
    %v1411 = vpack.c.b16 %v1343, %v1341
    %v1412 = vpack.c.b16 %v1344, %v1342
    %v1413 = vpack.c.b16 %v1347, %v1345
    %v1414 = vpack.c.b16 %v1348, %v1346
    %v1415 = vpack.c.b16 %v1351, %v1349
    %v1416 = vpack.c.b16 %v1352, %v1350
    %1481 = vmatprep.subr.bf16.mxu0 %v1354
    %1482 = vmatpush1.bf16.msra.mxu0 %v1353
    %1483 = vmatprep.subr.bf16.mxu0 %v1356
    %1484 = vmatpush1.bf16.msra.mxu0 %v1355
    %1485 = vmatprep.subr.bf16.mxu0 %v1358
    %1486 = vmatpush1.bf16.msra.mxu0 %v1357
    %1487 = vmatprep.subr.bf16.mxu0 %v1360
    %1488 = vmatpush1.bf16.msra.mxu0 %v1359
    %1489 = vmatprep.subr.bf16.mxu0 %v1362
    %1490 = vmatpush1.bf16.msra.mxu0 %v1361
    %1491 = vmatprep.subr.bf16.mxu0 %v1364
    %1492 = vmatpush1.bf16.msra.mxu0 %v1363
    %1493 = vmatprep.subr.bf16.mxu0 %v1366
    %1494 = vmatpush1.bf16.msra.mxu0 %v1365
    %1495 = vmatprep.subr.bf16.mxu0 %v1368
    %1496 = vmatpush1.bf16.msra.mxu0 %v1367
    %1497 = vmatprep.subr.bf16.mxu0 %v1370
    %1498 = vmatpush1.bf16.msra.mxu0 %v1369
    %1499 = vmatprep.subr.bf16.mxu0 %v1372
    %1500 = vmatpush1.bf16.msra.mxu0 %v1371
    %1501 = vmatprep.subr.bf16.mxu0 %v1374
    %1502 = vmatpush1.bf16.msra.mxu0 %v1373
    %1503 = vmatprep.subr.bf16.mxu0 %v1376
    %1504 = vmatpush1.bf16.msra.mxu0 %v1375
    %1505 = vmatprep.subr.bf16.mxu0 %v1378
    %1506 = vmatpush1.bf16.msra.mxu0 %v1377
    %1507 = vmatprep.subr.bf16.mxu0 %v1380
    %1508 = vmatpush1.bf16.msra.mxu0 %v1379
    %1509 = vmatprep.subr.bf16.mxu0 %v1382
    %1510 = vmatpush1.bf16.msra.mxu0 %v1381
    %1511 = vmatprep.subr.bf16.mxu0 %v1384
    %1512 = vmatpush1.bf16.msra.mxu0 %v1383
    %1513 = vmatprep.mubr.bf16.mxu0 %v1094
    %1514 = vmatmul.mubr.bf16.gmra.mrb[0].mxu0 %v1093
    %v1515 = vpop.f32.mrb[0].mxu0
    %v1516 = vadd.f32 0.0, %v1515
    %v1517 = vpop.f32.mrb[0].mxu0
    %v1518 = vadd.f32 0.0, %v1517
    %v1519 = vpop.f32.mrb[0].mxu0
    %v1520 = vadd.f32 0.0, %v1519
    %v1521 = vpop.f32.mrb[0].mxu0
    %v1522 = vadd.f32 0.0, %v1521
    %1523 = vdwg.mxu0
    %1524 = vmatprep.subr.bf16.mxu0 %v1386
    %1525 = vmatpush1.bf16.msra.mxu0 %v1385
    %1526 = vmatprep.subr.bf16.mxu0 %v1388
    %1527 = vmatpush1.bf16.msra.mxu0 %v1387
    %1528 = vmatprep.subr.bf16.mxu0 %v1390
    %1529 = vmatpush1.bf16.msra.mxu0 %v1389
    %1530 = vmatprep.subr.bf16.mxu0 %v1392
    %1531 = vmatpush1.bf16.msra.mxu0 %v1391
    %1532 = vmatprep.subr.bf16.mxu0 %v1394
    %1533 = vmatpush1.bf16.msra.mxu0 %v1393
    %1534 = vmatprep.subr.bf16.mxu0 %v1396
    %1535 = vmatpush1.bf16.msra.mxu0 %v1395
    %1536 = vmatprep.subr.bf16.mxu0 %v1398
    %1537 = vmatpush1.bf16.msra.mxu0 %v1397
    %1538 = vmatprep.subr.bf16.mxu0 %v1400
    %1539 = vmatpush1.bf16.msra.mxu0 %v1399
    %1540 = vmatprep.subr.bf16.mxu0 %v1402
    %1541 = vmatpush1.bf16.msra.mxu0 %v1401
    %1542 = vmatprep.subr.bf16.mxu0 %v1404
    %1543 = vmatpush1.bf16.msra.mxu0 %v1403
    %1544 = vmatprep.subr.bf16.mxu0 %v1406
    %1545 = vmatpush1.bf16.msra.mxu0 %v1405
    %1546 = vmatprep.subr.bf16.mxu0 %v1408
    %1547 = vmatpush1.bf16.msra.mxu0 %v1407
    %1548 = vmatprep.subr.bf16.mxu0 %v1410
    %1549 = vmatpush1.bf16.msra.mxu0 %v1409
    %1550 = vmatprep.subr.bf16.mxu0 %v1412
    %1551 = vmatpush1.bf16.msra.mxu0 %v1411
    %1552 = vmatprep.subr.bf16.mxu0 %v1414
    %1553 = vmatpush1.bf16.msra.mxu0 %v1413
    %1554 = vmatprep.subr.bf16.mxu0 %v1416
    %1555 = vmatpush1.bf16.msra.mxu0 %v1415
    %1556 = vmatprep.mubr.bf16.mxu0 %v1096
    %1557 = vmatmul.mubr.bf16.gmra.mrb[0].mxu0 %v1095
    %v1558 = vpop.f32.mrb[0].mxu0
    %v1559 = vadd.f32 %v1516, %v1558
    %v1560 = vpop.f32.mrb[0].mxu0
    %v1561 = vadd.f32 %v1518, %v1560
    %v1562 = vpop.f32.mrb[0].mxu0
    %v1563 = vadd.f32 %v1520, %v1562
    %v1564 = vpop.f32.mrb[0].mxu0
    %v1565 = vadd.f32 %v1522, %v1564
    %1566 = vdwg.mxu0
    %v1567 = vpack.c.bf16 %v1563, %v1559
    %v1568 = vpack.c.bf16 %v1565, %v1561
    %v1571 = vunpack.c.l.b16 %v1567
    %v1572 = vunpack.c.l.b16 %v1568
    %v1573 = vunpack.c.h.b16 %v1567
    %v1574 = vunpack.c.h.b16 %v1568
    %v1575 = vpack.c.b16 %v1572, %v1571
    %v1576 = vpack.c.b16 %v1574, %v1573
    %1579 = vst [vmem:[%s4] sm:$0xff] %v1575
    %1580 = vst [vmem:[%s4 + $0x8] sm:$0xff] %v1576
    // Predicated region
    $region30: #{qllama_mlp.1} parent=1 // pred_check
      _
    $region31: #{qllama_mlp.1} parent=1 // pred_check_branch
      %1582 = sbr.rel (0) target = $region33
    $region32: #{qllama_mlp.1} parent=1 // pred_region
      _
    $region33: #{qllama_mlp.1} parent=1 // pred_fallthru
      _
    // Predicated region
    $region34: #{qllama_mlp.1} parent=1 // pred_check
      _
    $region35: #{qllama_mlp.1} parent=1 // pred_check_branch
      %1584 = sbr.rel (0) target = $region37
    $region36: #{qllama_mlp.1} parent=1 // pred_region
      _
    $region37: #{qllama_mlp.1} parent=1 // pred_fallthru
      _
    %1585 = vsyncpa [#allocation4], 1
    %1586 = vsyncpa [#allocation6], 1

</llo_original>
